<compile_context>
chip_gen: v7x
topology: tpu7x:2x2x1
jax: 0.10.0
libtpu: 0.0.40
codegen_flags: <defaults>
</compile_context>

<pallas_src>
import math
from dataclasses import dataclass
from functools import partial

import jax
import jax.numpy as jnp
from jax.experimental import pallas as pl
from jax.experimental.pallas import tpu as pltpu


# ----------------------------- helpers (same as reference) -----------------------------

def create_var_map(vars: tuple) -> dict:
    var_map = {}
    for idx, var in enumerate(vars):
        var_map[var] = idx
    return var_map


def get_ids_for_var_map(vars: tuple, var_maps: dict) -> jnp.ndarray:
    return jnp.asarray([var_maps[var] for var in vars], dtype=jnp.int32)


@dataclass
class Metadata:
    single_vars: tuple          # tuple[str, ...]
    atmos_vars: dict            # dict[str, tuple[int, ...]]  (var -> pressure levels)
    lat: tuple                  # latitude values
    lon: tuple                  # longitude values


# ----------------------------------- Pallas kernel -------------------------------------

def _decoder_head_kernel(x_ref, w1t_ref, b1_ref, w2t_ref, b2_ref, w3t_ref, b3_ref, ot_ref):
    """3-layer MLP head on one token tile, computed in a transposed layout:
        Y^T = W3^T . g(W2^T . g(W1^T . X^T + b1) + b2) + b3

    x_ref  : (tile_m, D)  native token-major tile (no host-side transpose)
    w*t    : transposed weights (out_features, in_features)
    b*     : biases as column vectors (out_features, 1)
    ot_ref : (OUT, tile_m) lane-dense output tile
    """
    inv_sqrt2 = 0.7071067811865476

    def gelu_exact(v):  # matches torch.nn.GELU() (erf formulation)
        return 0.5 * v * (1.0 + jax.lax.erf(v * inv_sqrt2))

    x = x_ref[...]                                                       # (tile_m, D)
    # First matmul contracts both operands on their feature axis -> (D, tile_m)
    # activation directly; no transposed copy of x anywhere.
    h = jax.lax.dot_general(
        w1t_ref[...], x,
        dimension_numbers=(((1,), (1,)), ((), ())),
        preferred_element_type=jnp.float32,
    ) + b1_ref[...]
    h = gelu_exact(h)
    h = jnp.dot(w2t_ref[...], h, preferred_element_type=jnp.float32) + b2_ref[...]
    h = gelu_exact(h)
    y = jnp.dot(w3t_ref[...], h, preferred_element_type=jnp.float32) + b3_ref[...]
    ot_ref[...] = y.astype(ot_ref.dtype)


def _round_up(n: int, m: int) -> int:
    return ((n + m - 1) // m) * m


def _choose_tile_m(M: int, max_tile: int = 8192) -> int:
    """Smallest number of lane-dense (multiple-of-128) token tiles covering M (so we never
    pad by ~a full tile), capped at max_tile per tile; keep >= 2 grid steps once there is
    enough work so both v7x TensorCores get fed."""
    n_tiles = max(1, -(-M // max_tile))
    if M > 256 and n_tiles < 2:
        n_tiles = 2
    return _round_up(-(-M // n_tiles), 128)


@partial(jax.jit, static_argnames=("max_tile_m",))
def run_decoder_head_t(x_flat, w1t, b1c, w2t, b2c, w3t, b3c, *, max_tile_m=8192):
    """Apply the MLP head.  x_flat: (M, D) flattened tokens -> returns head(x_flat).T
    of shape (OUT, M)."""
    M, D = x_flat.shape
    OUT = w3t.shape[0]

    tile_m = _choose_tile_m(M, max_tile_m)
    grid_m = -(-M // tile_m)
    M_pad = grid_m * tile_m
    if M_pad != M:
        # Pad the native (M, D) layout (fused under jit); padded columns are sliced off.
        x_flat = jnp.pad(x_flat, ((0, M_pad - M), (0, 0)))

    cost = pl.CostEstimate(
        flops=2 * M_pad * (D * D + D * D + D * OUT),
        transcendentals=2 * M_pad * D,
        bytes_accessed=4 * (M_pad * D + M_pad * OUT + 2 * D * D + D * OUT + 2 * D + OUT),
    )

    const = lambda i: (0, 0)
    y_t = pl.pallas_call(
        _decoder_head_kernel,
        out_shape=jax.ShapeDtypeStruct((OUT, M_pad), x_flat.dtype),
        grid_spec=pltpu.PrefetchScalarGridSpec(
            num_scalar_prefetch=0,
            grid=(grid_m,),
            in_specs=[
                pl.BlockSpec((tile_m, D), lambda i: (i, 0)),   # x tile, native layout
                pl.BlockSpec((D, D), const),                   # W1^T (resident)
                pl.BlockSpec((D, 1), const),                   # b1
                pl.BlockSpec((D, D), const),                   # W2^T
                pl.BlockSpec((D, 1), const),                   # b2
                pl.BlockSpec((OUT, D), const),                 # W3^T
                pl.BlockSpec((OUT, 1), const),                 # b3
            ],
            out_specs=pl.BlockSpec((OUT, tile_m), lambda i: (0, i)),
        ),
        compiler_params=pltpu.CompilerParams(
            dimension_semantics=("parallel",),
            vmem_limit_bytes=48 * 1024 * 1024,   # 8192-token tiles on v5e's 16 MiB default
        ),
        cost_estimate=cost,
    )(x_flat, w1t, b1c, w2t, b2c, w3t, b3c)

    return y_t[:, :M]


# ------------------------------- jitted forward glue ------------------------------------

@partial(jax.jit, static_argnames=("H", "W", "P", "num_single", "num_atmos", "max_tile_m"))
def _forward_impl(x, w1t, b1c, w2t, b2c, w3t, b3c, out_var_ids, *,
                  H, W, P, num_single, num_atmos, max_tile_m=8192):
    B, L, D = x.shape
    M = B * L
    C_all = w3t.shape[0] // (P * P)
    C_out = out_var_ids.shape[0]

    # Fold the metadata channel gather into W3^T / b3: a ~(P*P*C*D) weight gather instead
    # of a full HBM pass over the (B, C, H, W) prediction tensor.
    w3t_g = w3t.reshape(P, P, C_all, D)[:, :, out_var_ids, :].reshape(P * P * C_out, D)
    b3c_g = b3c.reshape(P, P, C_all, 1)[:, :, out_var_ids, :].reshape(P * P * C_out, 1)

    y_t = run_decoder_head_t(x.reshape(M, D), w1t, b1c, w2t, b2c, w3t_g, b3c_g,
                             max_tile_m=max_tile_m)                 # (C_out*P*P, M)

    # Transposed unpatchify: consumes the kernel's (OUT, M) output directly
    # (mathematically identical to unpatchify(y_t.T.reshape(B, L, -1), H, W)).
    Hp, Wp = H // P, W // P
    xx = y_t.reshape(P, P, C_out, B, Hp, Wp)
    xx = jnp.einsum("pqcnhw->nchpwq", xx)
    preds = xx.reshape(B, C_out, H, W)

    single_preds = preds[:, :num_single]
    atmos_preds = preds[:, num_single:].reshape(B, num_atmos, -1, H, W)
    return single_preds, atmos_preds


# ----------------------------------- module wrapper ------------------------------------

class MultiScaleDecoder:
    def __init__(self, single_vars, atmos_vars, atmos_levels,
                 patch_size: int = 4, embed_dim: int = 32, decoder_depth: int = 2,
                 key=None, dtype=jnp.float32):
        assert decoder_depth == 2, "kernel implements the default decoder_depth=2 head"
        self.patch_size = patch_size
        self.embed_dim = embed_dim
        self.all_vars = single_vars + tuple(f"{v}_{l}" for v in atmos_vars for l in atmos_levels)
        self.all_var_map = create_var_map(self.all_vars)

        out_dim = len(self.all_vars) * patch_size ** 2
        if key is None:
            key = jax.random.PRNGKey(0)
        k1, k2, k3, k4, k5, k6 = jax.random.split(key, 6)
        s1 = 1.0 / math.sqrt(embed_dim)
        # deterministic synthetic init (uniform, Linear-style fan-in scaling)
        self.w1 = jax.random.uniform(k1, (embed_dim, embed_dim), dtype, -s1, s1)
        self.b1 = jax.random.uniform(k2, (1, embed_dim), dtype, -s1, s1)
        self.w2 = jax.random.uniform(k3, (embed_dim, embed_dim), dtype, -s1, s1)
        self.b2 = jax.random.uniform(k4, (1, embed_dim), dtype, -s1, s1)
        self.w3 = jax.random.uniform(k5, (embed_dim, out_dim), dtype, -s1, s1)
        self.b3 = jax.random.uniform(k6, (1, out_dim), dtype, -s1, s1)

        # Transposed copies consumed by the kernel (tokens-on-lanes output layout).
        self.w1t = self.w1.T
        self.w2t = self.w2.T
        self.w3t = self.w3.T
        self.b1c = self.b1.reshape(embed_dim, 1)
        self.b2c = self.b2.reshape(embed_dim, 1)
        self.b3c = self.b3.reshape(out_dim, 1)

    # ------------------------------------------------------------------
    def unpatchify(self, x, H, W):
        """Reference orientation: (B, L, V*P^2) -> (B, V, H, W)."""
        P = self.patch_size
        C = len(self.all_vars)
        Hp, Wp = H // P, W // P
        assert Hp * Wp == x.shape[1]
        x = x.reshape(x.shape[0], Hp, Wp, P, P, C)
        x = jnp.einsum("nhwpqc->nchpwq", x)
        return x.reshape(x.shape[0], C, Hp * P, Wp * P)

    # ------------------------------------------------------------------
    def forward(self, x, metadata: Metadata):
        all_vars = metadata.single_vars + tuple(
            f"{v}_{l}" for v in metadata.atmos_vars for l in metadata.atmos_vars[v]
        )
        H, W = len(metadata.lat), len(metadata.lon)
        out_var_ids = get_ids_for_var_map(all_vars, self.all_var_map)
        return _forward_impl(
            x, self.w1t, self.b1c, self.w2t, self.b2c, self.w3t, self.b3c, out_var_ids,
            H=H, W=W, P=self.patch_size,
            num_single=len(metadata.single_vars),
            num_atmos=len(metadata.atmos_vars),
        )

    # pure-JAX reference for the head (used only for the correctness check)
    def _head_ref(self, x_flat):
        def gelu(v):
            return 0.5 * v * (1.0 + jax.lax.erf(v * 0.7071067811865476))
        h = gelu(x_flat @ self.w1 + self.b1)
        h = gelu(h @ self.w2 + self.b2)
        return h @ self.w3 + self.b3


# ---------------------------------------- main ------------------------------------------

if __name__ == "__main__":
    # Small, consistent configuration:
    #   B=2, H=W=16, patch_size=4 -> L = (16/4)*(16/4) = 16 tokens
    #   embed_dim = 32
    #   single_vars = 2, atmos_vars = 2 with 3 levels -> V = 8, OUT = V*P^2 = 128
    single_vars = ("2t", "msl")
    atmos_vars = ("z", "t")
    atmos_levels = (500, 700, 850)
    patch_size = 4
    embed_dim = 32
    B, H, W = 2, 16, 16
    L = (H // patch_size) * (W // patch_size)

    key = jax.random.PRNGKey(0)
    k_params, k_x = jax.random.split(key)

    decoder = MultiScaleDecoder(single_vars, atmos_vars, atmos_levels,
                                patch_size=patch_size, embed_dim=embed_dim,
                                decoder_depth=2, key=k_params)

    metadata = Metadata(
        single_vars=single_vars,
        atmos_vars={v: atmos_levels for v in atmos_vars},
        lat=tuple(range(H)),
        lon=tuple(range(W)),
    )

    x = jax.random.normal(k_x, (B, L, embed_dim), dtype=jnp.float32)

    single_preds, atmos_preds = decoder.forward(x, metadata)
    jax.block_until_ready((single_preds, atmos_preds))

    # --- sanity: kernel head vs pure-JAX head ---
    y_t = run_decoder_head_t(x.reshape(B * L, embed_dim),
                             decoder.w1t, decoder.b1c, decoder.w2t, decoder.b2c,
                             decoder.w3t, decoder.b3c)
    y_ref = decoder._head_ref(x.reshape(B * L, embed_dim))
    assert jnp.allclose(y_t.T, y_ref, atol=1e-3, rtol=1e-4)

    # --- sanity: full forward vs pure-JAX reference (original-orientation unpatchify) ---
    preds_ref = decoder.unpatchify(y_ref.reshape(B, L, -1), H, W)
    all_vars_order = metadata.single_vars + tuple(
        f"{v}_{l}" for v in metadata.atmos_vars for l in metadata.atmos_vars[v]
    )
    ids = get_ids_for_var_map(all_vars_order, decoder.all_var_map)
    preds_ref = preds_ref[:, ids]
    single_ref = preds_ref[:, :len(single_vars)]
    atmos_ref = preds_ref[:, len(single_vars):].reshape(B, len(atmos_vars), -1, H, W)
    assert jnp.allclose(single_preds, single_ref, atol=1e-3, rtol=1e-4)
    assert jnp.allclose(atmos_preds, atmos_ref, atol=1e-3, rtol=1e-4)

    assert single_preds.shape == (B, len(single_vars), H, W)
    assert atmos_preds.shape == (B, len(atmos_vars), len(atmos_levels), H, W)

    print("KERNEL_OK")
</pallas_src>

<mosaic_0001>
module attributes {stable_mosaic.version = 11 : i64} {
  func.func @_decoder_head_kernel(%arg0: i32, %arg1: memref<128x32xf32, #tpu.memory_space<vmem>>, %arg2: memref<32x32xf32, #tpu.memory_space<vmem>>, %arg3: memref<32x1xf32, #tpu.memory_space<vmem>>, %arg4: memref<32x32xf32, #tpu.memory_space<vmem>>, %arg5: memref<32x1xf32, #tpu.memory_space<vmem>>, %arg6: memref<128x32xf32, #tpu.memory_space<vmem>>, %arg7: memref<128x1xf32, #tpu.memory_space<vmem>>, %arg8: memref<128x128xf32, #tpu.memory_space<vmem>>) attributes {dimension_semantics = [#tpu.dimension_semantics<parallel>], iteration_bounds = array<i64: 1>, scalar_prefetch = 0 : i64, scratch_operands = 0 : i64, tpu.core_type = #tpu.core_type<tc>, window_params = [{transform_indices = @transform_0, window_bounds = array<i64: 128, 32>}, {pipeline_mode = #tpu.pipeline_mode<synchronous>, transform_indices = @transform_1, window_bounds = array<i64: 32, 32>}, {pipeline_mode = #tpu.pipeline_mode<synchronous>, transform_indices = @transform_2, window_bounds = array<i64: 32, 1>}, {pipeline_mode = #tpu.pipeline_mode<synchronous>, transform_indices = @transform_3, window_bounds = array<i64: 32, 32>}, {pipeline_mode = #tpu.pipeline_mode<synchronous>, transform_indices = @transform_4, window_bounds = array<i64: 32, 1>}, {pipeline_mode = #tpu.pipeline_mode<synchronous>, transform_indices = @transform_5, window_bounds = array<i64: 128, 32>}, {pipeline_mode = #tpu.pipeline_mode<synchronous>, transform_indices = @transform_6, window_bounds = array<i64: 128, 1>}, {transform_indices = @transform_7, window_bounds = array<i64: 128, 128>}]} {
    %c0 = arith.constant 0 : index
    %c0_0 = arith.constant 0 : index
    %0 = vector.load %arg1[%c0, %c0_0] : memref<128x32xf32, #tpu.memory_space<vmem>>, vector<128x32xf32>
    %c0_1 = arith.constant 0 : index
    %c0_2 = arith.constant 0 : index
    %1 = vector.load %arg2[%c0_1, %c0_2] : memref<32x32xf32, #tpu.memory_space<vmem>>, vector<32x32xf32>
    %cst = arith.constant dense<0.000000e+00> : vector<32x128xf32>
    %2 = tpu.matmul %1, %0, %cst {dimension_numbers = #tpu.dot_dimension_numbers<[1], [1], [0], [0], [0, 0, 1, 0], [], []>} : vector<32x32xf32>, vector<128x32xf32>, vector<32x128xf32> -> vector<32x128xf32>
    %c0_3 = arith.constant 0 : index
    %c0_4 = arith.constant 0 : index
    %3 = vector.load %arg3[%c0_3, %c0_4] : memref<32x1xf32, #tpu.memory_space<vmem>>, vector<32x1xf32>
    %4 = vector.broadcast %3 : vector<32x1xf32> to vector<32x128xf32>
    %5 = arith.addf %2, %4 : vector<32x128xf32>
    %cst_5 = arith.constant 5.000000e-01 : f32
    %6 = vector.broadcast %cst_5 : f32 to vector<32x128xf32>
    %7 = arith.mulf %6, %5 : vector<32x128xf32>
    %cst_6 = arith.constant 0.707106769 : f32
    %8 = vector.broadcast %cst_6 : f32 to vector<32x128xf32>
    %9 = arith.mulf %5, %8 : vector<32x128xf32>
    %10 = math.erf %9 : vector<32x128xf32>
    %cst_7 = arith.constant 1.000000e+00 : f32
    %11 = vector.broadcast %cst_7 : f32 to vector<32x128xf32>
    %12 = arith.addf %11, %10 : vector<32x128xf32>
    %13 = arith.mulf %7, %12 : vector<32x128xf32>
    %c0_8 = arith.constant 0 : index
    %c0_9 = arith.constant 0 : index
    %14 = vector.load %arg4[%c0_8, %c0_9] : memref<32x32xf32, #tpu.memory_space<vmem>>, vector<32x32xf32>
    %cst_10 = arith.constant dense<0.000000e+00> : vector<32x128xf32>
    %15 = tpu.matmul %14, %13, %cst_10 {dimension_numbers = #tpu.dot_dimension_numbers<[1], [0], [0], [1], [0, 0, 1, 1], [], []>} : vector<32x32xf32>, vector<32x128xf32>, vector<32x128xf32> -> vector<32x128xf32>
    %c0_11 = arith.constant 0 : index
    %c0_12 = arith.constant 0 : index
    %16 = vector.load %arg5[%c0_11, %c0_12] : memref<32x1xf32, #tpu.memory_space<vmem>>, vector<32x1xf32>
    %17 = vector.broadcast %16 : vector<32x1xf32> to vector<32x128xf32>
    %18 = arith.addf %15, %17 : vector<32x128xf32>
    %cst_13 = arith.constant 5.000000e-01 : f32
    %19 = vector.broadcast %cst_13 : f32 to vector<32x128xf32>
    %20 = arith.mulf %19, %18 : vector<32x128xf32>
    %cst_14 = arith.constant 0.707106769 : f32
    %21 = vector.broadcast %cst_14 : f32 to vector<32x128xf32>
    %22 = arith.mulf %18, %21 : vector<32x128xf32>
    %23 = math.erf %22 : vector<32x128xf32>
    %cst_15 = arith.constant 1.000000e+00 : f32
    %24 = vector.broadcast %cst_15 : f32 to vector<32x128xf32>
    %25 = arith.addf %24, %23 : vector<32x128xf32>
    %26 = arith.mulf %20, %25 : vector<32x128xf32>
    %c0_16 = arith.constant 0 : index
    %c0_17 = arith.constant 0 : index
    %27 = vector.load %arg6[%c0_16, %c0_17] : memref<128x32xf32, #tpu.memory_space<vmem>>, vector<128x32xf32>
    %cst_18 = arith.constant dense<0.000000e+00> : vector<128x128xf32>
    %28 = tpu.matmul %27, %26, %cst_18 {dimension_numbers = #tpu.dot_dimension_numbers<[1], [0], [0], [1], [0, 0, 1, 1], [], []>} : vector<128x32xf32>, vector<32x128xf32>, vector<128x128xf32> -> vector<128x128xf32>
    %c0_19 = arith.constant 0 : index
    %c0_20 = arith.constant 0 : index
    %29 = vector.load %arg7[%c0_19, %c0_20] : memref<128x1xf32, #tpu.memory_space<vmem>>, vector<128x1xf32>
    %30 = vector.broadcast %29 : vector<128x1xf32> to vector<128x128xf32>
    %31 = arith.addf %28, %30 : vector<128x128xf32>
    %c0_21 = arith.constant 0 : index
    %c0_22 = arith.constant 0 : index
    %32 = vector.load %arg8[%c0_21, %c0_22] : memref<128x128xf32, #tpu.memory_space<vmem>>, vector<128x128xf32>
    tpu.vector_store %arg8[%c0_21, %c0_22], %31 {strides = array<i32>} : memref<128x128xf32, #tpu.memory_space<vmem>>, vector<128x128xf32>,
    return
  }
  func.func @transform_0(%arg0: i32) -> (i32, i32) {
    %c0_i32 = arith.constant 0 : i32
    %c0_i32_0 = arith.constant 0 : i32
    return %arg0, %c0_i32 : i32, i32
  }
  func.func @transform_1(%arg0: i32) -> (i32, i32) {
    %c0_i32 = arith.constant 0 : i32
    %c0_i32_0 = arith.constant 0 : i32
    %c0_i32_1 = arith.constant 0 : i32
    return %c0_i32, %c0_i32_0 : i32, i32
  }
  func.func @transform_2(%arg0: i32) -> (i32, i32) {
    %c0_i32 = arith.constant 0 : i32
    %c0_i32_0 = arith.constant 0 : i32
    %c0_i32_1 = arith.constant 0 : i32
    return %c0_i32, %c0_i32_0 : i32, i32
  }
  func.func @transform_3(%arg0: i32) -> (i32, i32) {
    %c0_i32 = arith.constant 0 : i32
    %c0_i32_0 = arith.constant 0 : i32
    %c0_i32_1 = arith.constant 0 : i32
    return %c0_i32, %c0_i32_0 : i32, i32
  }
  func.func @transform_4(%arg0: i32) -> (i32, i32) {
    %c0_i32 = arith.constant 0 : i32
    %c0_i32_0 = arith.constant 0 : i32
    %c0_i32_1 = arith.constant 0 : i32
    return %c0_i32, %c0_i32_0 : i32, i32
  }
  func.func @transform_5(%arg0: i32) -> (i32, i32) {
    %c0_i32 = arith.constant 0 : i32
    %c0_i32_0 = arith.constant 0 : i32
    %c0_i32_1 = arith.constant 0 : i32
    return %c0_i32, %c0_i32_0 : i32, i32
  }
  func.func @transform_6(%arg0: i32) -> (i32, i32) {
    %c0_i32 = arith.constant 0 : i32
    %c0_i32_0 = arith.constant 0 : i32
    %c0_i32_1 = arith.constant 0 : i32
    return %c0_i32, %c0_i32_0 : i32, i32
  }
  func.func @transform_7(%arg0: i32) -> (i32, i32) {
    %c0_i32 = arith.constant 0 : i32
    %c0_i32_0 = arith.constant 0 : i32
    return %c0_i32, %arg0 : i32, i32
  }
}

</mosaic_0001>

<llo_original>
// kernel: run_decoder_head_t.1
$region0: #{run_decoder_head_t.1}
  #allocation0 [shape = 'u32[]', space=smem, size = 0x4, offset = 0x4, fixed_abs, tag = 'smem constant byte address 0x4 - core index']
  #allocation1 [shape = 'u32[144,128]{1,0:T(1,128)}', space=vmem, size = 0x12000, scoped, tag = 'internal scratch']
  %s0 = inlined_call_operand.vmem [shape: f32[128,32], index: 0, kind: input, shape index: {}]
  %s1 = inlined_call_operand.vmem [shape: f32[32,32], index: 1, kind: input, shape index: {}]
  %s2 = inlined_call_operand.vmem [shape: f32[32,1], index: 2, kind: input, shape index: {}]
  %s3 = inlined_call_operand.vmem [shape: f32[32,32], index: 3, kind: input, shape index: {}]
  %s4 = inlined_call_operand.vmem [shape: f32[32,1], index: 4, kind: input, shape index: {}]
  %s5 = inlined_call_operand.vmem [shape: f32[128,32], index: 5, kind: input, shape index: {}]
  %s6 = inlined_call_operand.vmem [shape: f32[128,1], index: 6, kind: input, shape index: {}]
  %s7 = inlined_call_operand.vmem [shape: f32[128,128], index: 7, kind: output, shape index: {}]
  %s8 = sld [smem:[#allocation0]]
  $region38: #{run_decoder_head_t.1} parent=0
    _
  %s10 = ssub.s32 1, %s8
  %s11 = scalar_select 0, %s10, %s8
  // Predicated region
  $region2: #{run_decoder_head_t.1} parent=0 // pred_check
    _
  $region3: #{run_decoder_head_t.1} parent=0 // pred_check_branch
    %13 = sbr.rel (0) target = $region5
  $region4: #{run_decoder_head_t.1} parent=0 // pred_region
    _
  $region5: #{run_decoder_head_t.1} parent=0 // pred_fallthru
    _
  // Predicated region
  $region6: #{run_decoder_head_t.1} parent=0 // pred_check
    _
  $region7: #{run_decoder_head_t.1} parent=0 // pred_check_branch
    %15 = sbr.rel (0) target = $region9
  $region8: #{run_decoder_head_t.1} parent=0 // pred_region
    _
  $region9: #{run_decoder_head_t.1} parent=0 // pred_fallthru
    _
  // Predicated region
  $region10: #{run_decoder_head_t.1} parent=0 // pred_check
    _
  $region11: #{run_decoder_head_t.1} parent=0 // pred_check_branch
    %17 = sbr.rel (0) target = $region13
  $region12: #{run_decoder_head_t.1} parent=0 // pred_region
    _
  $region13: #{run_decoder_head_t.1} parent=0 // pred_fallthru
    _
  // Predicated region
  $region14: #{run_decoder_head_t.1} parent=0 // pred_check
    _
  $region15: #{run_decoder_head_t.1} parent=0 // pred_check_branch
    %19 = sbr.rel (0) target = $region17
  $region16: #{run_decoder_head_t.1} parent=0 // pred_region
    _
  $region17: #{run_decoder_head_t.1} parent=0 // pred_fallthru
    _
  // Predicated region
  $region18: #{run_decoder_head_t.1} parent=0 // pred_check
    _
  $region19: #{run_decoder_head_t.1} parent=0 // pred_check_branch
    %21 = sbr.rel (0) target = $region21
  $region20: #{run_decoder_head_t.1} parent=0 // pred_region
    _
  $region21: #{run_decoder_head_t.1} parent=0 // pred_fallthru
    _
  // Predicated region
  $region22: #{run_decoder_head_t.1} parent=0 // pred_check
    _
  $region23: #{run_decoder_head_t.1} parent=0 // pred_check_branch
    %23 = sbr.rel (0) target = $region25
  $region24: #{run_decoder_head_t.1} parent=0 // pred_region
    _
  $region25: #{run_decoder_head_t.1} parent=0 // pred_fallthru
    _
  // Predicated region
  $region26: #{run_decoder_head_t.1} parent=0 // pred_check
    _
  $region27: #{run_decoder_head_t.1} parent=0 // pred_check_branch
    %25 = sbr.rel (0) target = $region29
  $region28: #{run_decoder_head_t.1} parent=0 // pred_region
    _
  $region29: #{run_decoder_head_t.1} parent=0 // pred_fallthru
    _
  %v26 = vld [vmem:[%s0] sm:$0xff]
  %v27 = vld [vmem:[%s0 + $0x8] sm:$0xff]
  %v28 = vld [vmem:[%s0 + $0x10] sm:$0xff]
  %v29 = vld [vmem:[%s0 + $0x18] sm:$0xff]
  %v30 = vld [vmem:[%s0 + $0x20] sm:$0xff]
  %v31 = vld [vmem:[%s0 + $0x28] sm:$0xff]
  %v32 = vld [vmem:[%s0 + $0x30] sm:$0xff]
  %v33 = vld [vmem:[%s0 + $0x38] sm:$0xff]
  %v34 = vld [vmem:[%s0 + $0x40] sm:$0xff]
  %v35 = vld [vmem:[%s0 + $0x48] sm:$0xff]
  %v36 = vld [vmem:[%s0 + $0x50] sm:$0xff]
  %v37 = vld [vmem:[%s0 + $0x58] sm:$0xff]
  %v38 = vld [vmem:[%s0 + $0x60] sm:$0xff]
  %v39 = vld [vmem:[%s0 + $0x68] sm:$0xff]
  %v40 = vld [vmem:[%s0 + $0x70] sm:$0xff]
  %v41 = vld [vmem:[%s0 + $0x78] sm:$0xff]
  %v42 = vld [vmem:[%s1] sm:$0xff]
  %v43 = vld [vmem:[%s1 + $0x8] sm:$0xff]
  %v44 = vld [vmem:[%s1 + $0x10] sm:$0xff]
  %v45 = vld [vmem:[%s1 + $0x18] sm:$0xff]
  %v46 = vld [vmem:[%s2] sm:$0xff]
  %v47 = vld [vmem:[%s2 + $0x8] sm:$0xff]
  %v48 = vld [vmem:[%s2 + $0x10] sm:$0xff]
  %v49 = vld [vmem:[%s2 + $0x18] sm:$0xff]
  %51 = vset.pattern.permute.xlu0 0
  %52 = vperm.xlu0 %51, %v46
  %v53 = vpop.permute.xlu0 %52
  %56 = vset.pattern.permute.xlu0 0
  %57 = vperm.xlu0 %56, %v47
  %v58 = vpop.permute.xlu0 %57
  %61 = vset.pattern.permute.xlu0 0
  %62 = vperm.xlu0 %61, %v48
  %v63 = vpop.permute.xlu0 %62
  %66 = vset.pattern.permute.xlu0 0
  %67 = vperm.xlu0 %66, %v49
  %v68 = vpop.permute.xlu0 %67
  %vm70 = vcmask 261120
  %v72 = vsel %vm70, %v42, 0
  %v75 = vsel %vm70, %v43, 0
  %v78 = vsel %vm70, %v44, 0
  %v81 = vsel %vm70, %v45, 0
  %v84 = vsel %vm70, %v26, 0
  %v87 = vsel %vm70, %v27, 0
  %v90 = vsel %vm70, %v28, 0
  %v93 = vsel %vm70, %v29, 0
  %v96 = vsel %vm70, %v30, 0
  %v99 = vsel %vm70, %v31, 0
  %v102 = vsel %vm70, %v32, 0
  %v105 = vsel %vm70, %v33, 0
  %v108 = vsel %vm70, %v34, 0
  %v111 = vsel %vm70, %v35, 0
  %v114 = vsel %vm70, %v36, 0
  %v117 = vsel %vm70, %v37, 0
  %v120 = vsel %vm70, %v38, 0
  %v123 = vsel %vm70, %v39, 0
  %v126 = vsel %vm70, %v40, 0
  %v129 = vsel %vm70, %v41, 0
  %131 = vmatprep.subr.mxu0 0.0
  %132 = vmatpush1.xpose.msra.mxu0 %v84
  %133 = vmatprep.subr.mxu0 0.0
  %134 = vmatpush1.xpose.msra.mxu0 %v87
  %135 = vmatprep.subr.mxu0 0.0
  %136 = vmatpush1.xpose.msra.mxu0 %v90
  %137 = vmatprep.subr.mxu0 0.0
  %138 = vmatpush1.xpose.msra.mxu0 %v93
  %139 = vmatprep.subr.mxu0 0.0
  %140 = vmatpush1.xpose.msra.mxu0 %v96
  %141 = vmatprep.subr.mxu0 0.0
  %142 = vmatpush1.xpose.msra.mxu0 %v99
  %143 = vmatprep.subr.mxu0 0.0
  %144 = vmatpush1.xpose.msra.mxu0 %v102
  %145 = vmatprep.subr.mxu0 0.0
  %146 = vmatpush1.xpose.msra.mxu0 %v105
  %147 = vmatprep.subr.mxu0 0.0
  %148 = vmatpush1.xpose.msra.mxu0 %v108
  %149 = vmatprep.subr.mxu0 0.0
  %150 = vmatpush1.xpose.msra.mxu0 %v111
  %151 = vmatprep.subr.mxu0 0.0
  %152 = vmatpush1.xpose.msra.mxu0 %v114
  %153 = vmatprep.subr.mxu0 0.0
  %154 = vmatpush1.xpose.msra.mxu0 %v117
  %155 = vmatprep.subr.mxu0 0.0
  %156 = vmatpush1.xpose.msra.mxu0 %v120
  %157 = vmatprep.subr.mxu0 0.0
  %158 = vmatpush1.xpose.msra.mxu0 %v123
  %159 = vmatprep.subr.mxu0 0.0
  %160 = vmatpush1.xpose.msra.mxu0 %v126
  %161 = vmatprep.subr.mxu0 0.0
  %162 = vmatpush1.xpose.msra.mxu0 %v129
  %163 = vmatprep.subr.mxu0 0.0
  %164 = vmatpush1.xpose.msra.mxu0 0.0
  %165 = vmatprep.subr.mxu0 0.0
  %166 = vmatpush1.xpose.msra.mxu0 0.0
  %167 = vmatprep.subr.mxu0 0.0
  %168 = vmatpush1.xpose.msra.mxu0 0.0
  %169 = vmatprep.subr.mxu0 0.0
  %170 = vmatpush1.xpose.msra.mxu0 0.0
  %171 = vmatprep.subr.mxu0 0.0
  %172 = vmatpush1.xpose.msra.mxu0 0.0
  %173 = vmatprep.subr.mxu0 0.0
  %174 = vmatpush1.xpose.msra.mxu0 0.0
  %175 = vmatprep.subr.mxu0 0.0
  %176 = vmatpush1.xpose.msra.mxu0 0.0
  %177 = vmatprep.subr.mxu0 0.0
  %178 = vmatpush1.xpose.msra.mxu0 0.0
  %179 = vmatprep.subr.mxu0 0.0
  %180 = vmatpush1.xpose.msra.mxu0 0.0
  %181 = vmatprep.subr.mxu0 0.0
  %182 = vmatpush1.xpose.msra.mxu0 0.0
  %183 = vmatprep.subr.mxu0 0.0
  %184 = vmatpush1.xpose.msra.mxu0 0.0
  %185 = vmatprep.subr.mxu0 0.0
  %186 = vmatpush1.xpose.msra.mxu0 0.0
  %187 = vmatprep.subr.mxu0 0.0
  %188 = vmatpush1.xpose.msra.mxu0 0.0
  %189 = vmatprep.subr.mxu0 0.0
  %190 = vmatpush1.xpose.msra.mxu0 0.0
  %191 = vmatprep.subr.mxu0 0.0
  %192 = vmatpush1.xpose.msra.mxu0 0.0
  %193 = vmatprep.subr.mxu0 0.0
  %194 = vmatpush1.xpose.msra.mxu0 0.0
  %195 = vmatprep.mubr.f32.mxu0 0.0
  %196 = vmatmul.mubr.f32.gmra.mrb[0].mxu0 %v72
  %v197 = vpop.f32.mrb[0].mxu0
  %v198 = vadd.f32 %v53, %v197
  %v199 = vpop.f32.mrb[0].mxu0
  %200 = vmatprep.mubr.f32.mxu0 0.0
  %201 = vmatmul.mubr.f32.gmra.mrb[0].mxu0 %v75
  %v202 = vpop.f32.mrb[0].mxu0
  %v203 = vadd.f32 %v58, %v202
  %v204 = vpop.f32.mrb[0].mxu0
  %205 = vmatprep.mubr.f32.mxu0 0.0
  %206 = vmatmul.mubr.f32.gmra.mrb[0].mxu0 %v78
  %v207 = vpop.f32.mrb[0].mxu0
  %v208 = vadd.f32 %v63, %v207
  %v209 = vpop.f32.mrb[0].mxu0
  %210 = vmatprep.mubr.f32.mxu0 0.0
  %211 = vmatmul.mubr.f32.gmra.mrb[0].mxu0 %v81
  %v212 = vpop.f32.mrb[0].mxu0
  %v213 = vadd.f32 %v68, %v212
  %v214 = vpop.f32.mrb[0].mxu0
  %215 = vdwg.mxu0
  %v216 = vmul.f32 %v198, 0.5
  %v217 = vmul.f32 %v203, 0.5
  %v218 = vmul.f32 %v208, 0.5
  %v219 = vmul.f32 %v213, 0.5
  %v220 = vmul.f32 %v198, 0.70710677
  %v221 = vmul.f32 %v203, 0.70710677
  %v222 = vmul.f32 %v208, 0.70710677
  %v223 = vmul.f32 %v213, 0.70710677
  %v224 = verf.f32.pop %v220
  %v225 = verf.f32.pop %v221
  %v226 = verf.f32.pop %v222
  %v227 = verf.f32.pop %v223
  %v228 = vadd.f32 %v224, 1.0
  %v229 = vadd.f32 %v225, 1.0
  %v230 = vadd.f32 %v226, 1.0
  %v231 = vadd.f32 %v227, 1.0
  %v232 = vmul.f32 %v216, %v228
  %v233 = vmul.f32 %v217, %v229
  %v234 = vmul.f32 %v218, %v230
  %v235 = vmul.f32 %v219, %v231
  %v236 = vld [vmem:[%s3] sm:$0xff]
  %v237 = vld [vmem:[%s3 + $0x8] sm:$0xff]
  %v238 = vld [vmem:[%s3 + $0x10] sm:$0xff]
  %v239 = vld [vmem:[%s3 + $0x18] sm:$0xff]
  %v240 = vld [vmem:[%s4] sm:$0xff]
  %v241 = vld [vmem:[%s4 + $0x8] sm:$0xff]
  %v242 = vld [vmem:[%s4 + $0x10] sm:$0xff]
  %v243 = vld [vmem:[%s4 + $0x18] sm:$0xff]
  %245 = vset.pattern.permute.xlu0 0
  %246 = vperm.xlu0 %245, %v240
  %v247 = vpop.permute.xlu0 %246
  %250 = vset.pattern.permute.xlu0 0
  %251 = vperm.xlu0 %250, %v241
  %v252 = vpop.permute.xlu0 %251
  %255 = vset.pattern.permute.xlu0 0
  %256 = vperm.xlu0 %255, %v242
  %v257 = vpop.permute.xlu0 %256
  %260 = vset.pattern.permute.xlu0 0
  %261 = vperm.xlu0 %260, %v243
  %v262 = vpop.permute.xlu0 %261
  %v265 = vsel %vm70, %v236, 0
  %v268 = vsel %vm70, %v237, 0
  %v271 = vsel %vm70, %v238, 0
  %v274 = vsel %vm70, %v239, 0
  %276 = vmatprep.subr.mxu0 0.0
  %277 = vmatpush1.msra.mxu0 %v232
  %278 = vmatprep.subr.mxu0 0.0
  %279 = vmatpush1.msra.mxu0 %v233
  %280 = vmatprep.subr.mxu0 0.0
  %281 = vmatpush1.msra.mxu0 %v234
  %282 = vmatprep.subr.mxu0 0.0
  %283 = vmatpush1.msra.mxu0 %v235
  %284 = vmatprep.subr.mxu0 0.0
  %285 = vmatpush1.msra.mxu0 0.0
  %286 = vmatprep.subr.mxu0 0.0
  %287 = vmatpush1.msra.mxu0 0.0
  %288 = vmatprep.subr.mxu0 0.0
  %289 = vmatpush1.msra.mxu0 0.0
  %290 = vmatprep.subr.mxu0 0.0
  %291 = vmatpush1.msra.mxu0 0.0
  %292 = vmatprep.subr.mxu0 0.0
  %293 = vmatpush1.msra.mxu0 0.0
  %294 = vmatprep.subr.mxu0 0.0
  %295 = vmatpush1.msra.mxu0 0.0
  %296 = vmatprep.subr.mxu0 0.0
  %297 = vmatpush1.msra.mxu0 0.0
  %298 = vmatprep.subr.mxu0 0.0
  %299 = vmatpush1.msra.mxu0 0.0
  %300 = vmatprep.subr.mxu0 0.0
  %301 = vmatpush1.msra.mxu0 0.0
  %302 = vmatprep.subr.mxu0 0.0
  %303 = vmatpush1.msra.mxu0 0.0
  %304 = vmatprep.subr.mxu0 0.0
  %305 = vmatpush1.msra.mxu0 0.0
  %306 = vmatprep.subr.mxu0 0.0
  %307 = vmatpush1.msra.mxu0 0.0
  %308 = vmatprep.subr.mxu0 0.0
  %309 = vmatpush1.msra.mxu0 0.0
  %310 = vmatprep.subr.mxu0 0.0
  %311 = vmatpush1.msra.mxu0 0.0
  %312 = vmatprep.subr.mxu0 0.0
  %313 = vmatpush1.msra.mxu0 0.0
  %314 = vmatprep.subr.mxu0 0.0
  %315 = vmatpush1.msra.mxu0 0.0
  %316 = vmatprep.subr.mxu0 0.0
  %317 = vmatpush1.msra.mxu0 0.0
  %318 = vmatprep.subr.mxu0 0.0
  %319 = vmatpush1.msra.mxu0 0.0
  %320 = vmatprep.subr.mxu0 0.0
  %321 = vmatpush1.msra.mxu0 0.0
  %322 = vmatprep.subr.mxu0 0.0
  %323 = vmatpush1.msra.mxu0 0.0
  %324 = vmatprep.subr.mxu0 0.0
  %325 = vmatpush1.msra.mxu0 0.0
  %326 = vmatprep.subr.mxu0 0.0
  %327 = vmatpush1.msra.mxu0 0.0
  %328 = vmatprep.subr.mxu0 0.0
  %329 = vmatpush1.msra.mxu0 0.0
  %330 = vmatprep.subr.mxu0 0.0
  %331 = vmatpush1.msra.mxu0 0.0
  %332 = vmatprep.subr.mxu0 0.0
  %333 = vmatpush1.msra.mxu0 0.0
  %334 = vmatprep.subr.mxu0 0.0
  %335 = vmatpush1.msra.mxu0 0.0
  %336 = vmatprep.subr.mxu0 0.0
  %337 = vmatpush1.msra.mxu0 0.0
  %338 = vmatprep.subr.mxu0 0.0
  %339 = vmatpush1.msra.mxu0 0.0
  %340 = vmatprep.mubr.f32.mxu0 0.0
  %341 = vmatmul.mubr.f32.gmra.mrb[0].mxu0 %v265
  %v342 = vpop.f32.mrb[0].mxu0
  %v343 = vadd.f32 %v247, %v342
  %v344 = vpop.f32.mrb[0].mxu0
  %345 = vmatprep.mubr.f32.mxu0 0.0
  %346 = vmatmul.mubr.f32.gmra.mrb[0].mxu0 %v268
  %v347 = vpop.f32.mrb[0].mxu0
  %v348 = vadd.f32 %v252, %v347
  %v349 = vpop.f32.mrb[0].mxu0
  %350 = vmatprep.mubr.f32.mxu0 0.0
  %351 = vmatmul.mubr.f32.gmra.mrb[0].mxu0 %v271
  %v352 = vpop.f32.mrb[0].mxu0
  %v353 = vadd.f32 %v257, %v352
  %v354 = vpop.f32.mrb[0].mxu0
  %355 = vmatprep.mubr.f32.mxu0 0.0
  %356 = vmatmul.mubr.f32.gmra.mrb[0].mxu0 %v274
  %v357 = vpop.f32.mrb[0].mxu0
  %v358 = vadd.f32 %v262, %v357
  %v359 = vpop.f32.mrb[0].mxu0
  %360 = vdwg.mxu0
  %v361 = vmul.f32 %v343, 0.5
  %v362 = vmul.f32 %v348, 0.5
  %v363 = vmul.f32 %v353, 0.5
  %v364 = vmul.f32 %v358, 0.5
  %v365 = vmul.f32 %v343, 0.70710677
  %v366 = vmul.f32 %v348, 0.70710677
  %v367 = vmul.f32 %v353, 0.70710677
  %v368 = vmul.f32 %v358, 0.70710677
  %v369 = verf.f32.pop %v365
  %v370 = verf.f32.pop %v366
  %v371 = verf.f32.pop %v367
  %v372 = verf.f32.pop %v368
  %v373 = vadd.f32 %v369, 1.0
  %v374 = vadd.f32 %v370, 1.0
  %v375 = vadd.f32 %v371, 1.0
  %v376 = vadd.f32 %v372, 1.0
  %v377 = vmul.f32 %v361, %v373
  %v378 = vmul.f32 %v362, %v374
  %v379 = vmul.f32 %v363, %v375
  %v380 = vmul.f32 %v364, %v376
  %v381 = vld [vmem:[%s5] sm:$0xff]
  %v382 = vld [vmem:[%s5 + $0x8] sm:$0xff]
  %v383 = vld [vmem:[%s5 + $0x10] sm:$0xff]
  %v384 = vld [vmem:[%s5 + $0x18] sm:$0xff]
  %v385 = vld [vmem:[%s5 + $0x20] sm:$0xff]
  %v386 = vld [vmem:[%s5 + $0x28] sm:$0xff]
  %v387 = vld [vmem:[%s5 + $0x30] sm:$0xff]
  %v388 = vld [vmem:[%s5 + $0x38] sm:$0xff]
  %v389 = vld [vmem:[%s5 + $0x40] sm:$0xff]
  %v390 = vld [vmem:[%s5 + $0x48] sm:$0xff]
  %v391 = vld [vmem:[%s5 + $0x50] sm:$0xff]
  %v392 = vld [vmem:[%s5 + $0x58] sm:$0xff]
  %v393 = vld [vmem:[%s5 + $0x60] sm:$0xff]
  %v394 = vld [vmem:[%s5 + $0x68] sm:$0xff]
  %v395 = vld [vmem:[%s5 + $0x70] sm:$0xff]
  %v396 = vld [vmem:[%s5 + $0x78] sm:$0xff]
  %v397 = vld [vmem:[%s6] sm:$0xff]
  %v398 = vld [vmem:[%s6 + $0x8] sm:$0xff]
  %v399 = vld [vmem:[%s6 + $0x10] sm:$0xff]
  %v400 = vld [vmem:[%s6 + $0x18] sm:$0xff]
  %v401 = vld [vmem:[%s6 + $0x20] sm:$0xff]
  %v402 = vld [vmem:[%s6 + $0x28] sm:$0xff]
  %v403 = vld [vmem:[%s6 + $0x30] sm:$0xff]
  %v404 = vld [vmem:[%s6 + $0x38] sm:$0xff]
  %v405 = vld [vmem:[%s6 + $0x40] sm:$0xff]
  %v406 = vld [vmem:[%s6 + $0x48] sm:$0xff]
  %v407 = vld [vmem:[%s6 + $0x50] sm:$0xff]
  %v408 = vld [vmem:[%s6 + $0x58] sm:$0xff]
  %v409 = vld [vmem:[%s6 + $0x60] sm:$0xff]
  %v410 = vld [vmem:[%s6 + $0x68] sm:$0xff]
  %v411 = vld [vmem:[%s6 + $0x70] sm:$0xff]
  %v412 = vld [vmem:[%s6 + $0x78] sm:$0xff]
  %414 = vset.pattern.permute.xlu0 0
  %415 = vperm.xlu0 %414, %v397
  %v416 = vpop.permute.xlu0 %415
  %419 = vset.pattern.permute.xlu0 0
  %420 = vperm.xlu0 %419, %v398
  %v421 = vpop.permute.xlu0 %420
  %424 = vset.pattern.permute.xlu0 0
  %425 = vperm.xlu0 %424, %v399
  %v426 = vpop.permute.xlu0 %425
  %429 = vset.pattern.permute.xlu0 0
  %430 = vperm.xlu0 %429, %v400
  %v431 = vpop.permute.xlu0 %430
  %434 = vset.pattern.permute.xlu0 0
  %435 = vperm.xlu0 %434, %v401
  %v436 = vpop.permute.xlu0 %435
  %439 = vset.pattern.permute.xlu0 0
  %440 = vperm.xlu0 %439, %v402
  %v441 = vpop.permute.xlu0 %440
  %444 = vset.pattern.permute.xlu0 0
  %445 = vperm.xlu0 %444, %v403
  %v446 = vpop.permute.xlu0 %445
  %449 = vset.pattern.permute.xlu0 0
  %450 = vperm.xlu0 %449, %v404
  %v451 = vpop.permute.xlu0 %450
  %454 = vset.pattern.permute.xlu0 0
  %455 = vperm.xlu0 %454, %v405
  %v456 = vpop.permute.xlu0 %455
  %459 = vset.pattern.permute.xlu0 0
  %460 = vperm.xlu0 %459, %v406
  %v461 = vpop.permute.xlu0 %460
  %464 = vset.pattern.permute.xlu0 0
  %465 = vperm.xlu0 %464, %v407
  %v466 = vpop.permute.xlu0 %465
  %469 = vset.pattern.permute.xlu0 0
  %470 = vperm.xlu0 %469, %v408
  %v471 = vpop.permute.xlu0 %470
  %474 = vset.pattern.permute.xlu0 0
  %475 = vperm.xlu0 %474, %v409
  %v476 = vpop.permute.xlu0 %475
  %479 = vset.pattern.permute.xlu0 0
  %480 = vperm.xlu0 %479, %v410
  %v481 = vpop.permute.xlu0 %480
  %484 = vset.pattern.permute.xlu0 0
  %485 = vperm.xlu0 %484, %v411
  %v486 = vpop.permute.xlu0 %485
  %489 = vset.pattern.permute.xlu0 0
  %490 = vperm.xlu0 %489, %v412
  %v491 = vpop.permute.xlu0 %490
  %v494 = vsel %vm70, %v381, 0
  %v497 = vsel %vm70, %v382, 0
  %v500 = vsel %vm70, %v383, 0
  %v503 = vsel %vm70, %v384, 0
  %v506 = vsel %vm70, %v385, 0
  %v509 = vsel %vm70, %v386, 0
  %v512 = vsel %vm70, %v387, 0
  %v515 = vsel %vm70, %v388, 0
  %v518 = vsel %vm70, %v389, 0
  %v521 = vsel %vm70, %v390, 0
  %v524 = vsel %vm70, %v391, 0
  %v527 = vsel %vm70, %v392, 0
  %v530 = vsel %vm70, %v393, 0
  %v533 = vsel %vm70, %v394, 0
  %v536 = vsel %vm70, %v395, 0
  %v539 = vsel %vm70, %v396, 0
  %541 = vmatprep.subr.mxu0 0.0
  %542 = vmatpush1.msra.mxu0 %v377
  %543 = vmatprep.subr.mxu0 0.0
  %544 = vmatpush1.msra.mxu0 %v378
  %545 = vmatprep.subr.mxu0 0.0
  %546 = vmatpush1.msra.mxu0 %v379
  %547 = vmatprep.subr.mxu0 0.0
  %548 = vmatpush1.msra.mxu0 %v380
  %549 = vmatprep.subr.mxu0 0.0
  %550 = vmatpush1.msra.mxu0 0.0
  %551 = vmatprep.subr.mxu0 0.0
  %552 = vmatpush1.msra.mxu0 0.0
  %553 = vmatprep.subr.mxu0 0.0
  %554 = vmatpush1.msra.mxu0 0.0
  %555 = vmatprep.subr.mxu0 0.0
  %556 = vmatpush1.msra.mxu0 0.0
  %557 = vmatprep.subr.mxu0 0.0
  %558 = vmatpush1.msra.mxu0 0.0
  %559 = vmatprep.subr.mxu0 0.0
  %560 = vmatpush1.msra.mxu0 0.0
  %561 = vmatprep.subr.mxu0 0.0
  %562 = vmatpush1.msra.mxu0 0.0
  %563 = vmatprep.subr.mxu0 0.0
  %564 = vmatpush1.msra.mxu0 0.0
  %565 = vmatprep.subr.mxu0 0.0
  %566 = vmatpush1.msra.mxu0 0.0
  %567 = vmatprep.subr.mxu0 0.0
  %568 = vmatpush1.msra.mxu0 0.0
  %569 = vmatprep.subr.mxu0 0.0
  %570 = vmatpush1.msra.mxu0 0.0
  %571 = vmatprep.subr.mxu0 0.0
  %572 = vmatpush1.msra.mxu0 0.0
  %573 = vmatprep.subr.mxu0 0.0
  %574 = vmatpush1.msra.mxu0 0.0
  %575 = vmatprep.subr.mxu0 0.0
  %576 = vmatpush1.msra.mxu0 0.0
  %577 = vmatprep.subr.mxu0 0.0
  %578 = vmatpush1.msra.mxu0 0.0
  %579 = vmatprep.subr.mxu0 0.0
  %580 = vmatpush1.msra.mxu0 0.0
  %581 = vmatprep.subr.mxu0 0.0
  %582 = vmatpush1.msra.mxu0 0.0
  %583 = vmatprep.subr.mxu0 0.0
  %584 = vmatpush1.msra.mxu0 0.0
  %585 = vmatprep.subr.mxu0 0.0
  %586 = vmatpush1.msra.mxu0 0.0
  %587 = vmatprep.subr.mxu0 0.0
  %588 = vmatpush1.msra.mxu0 0.0
  %589 = vmatprep.subr.mxu0 0.0
  %590 = vmatpush1.msra.mxu0 0.0
  %591 = vmatprep.subr.mxu0 0.0
  %592 = vmatpush1.msra.mxu0 0.0
  %593 = vmatprep.subr.mxu0 0.0
  %594 = vmatpush1.msra.mxu0 0.0
  %595 = vmatprep.subr.mxu0 0.0
  %596 = vmatpush1.msra.mxu0 0.0
  %597 = vmatprep.subr.mxu0 0.0
  %598 = vmatpush1.msra.mxu0 0.0
  %599 = vmatprep.subr.mxu0 0.0
  %600 = vmatpush1.msra.mxu0 0.0
  %601 = vmatprep.subr.mxu0 0.0
  %602 = vmatpush1.msra.mxu0 0.0
  %603 = vmatprep.subr.mxu0 0.0
  %604 = vmatpush1.msra.mxu0 0.0
  %605 = vmatprep.mubr.f32.mxu0 0.0
  %606 = vmatmul.mubr.f32.gmra.mrb[0].mxu0 %v494
  %v607 = vpop.f32.mrb[0].mxu0
  %v608 = vadd.f32 %v416, %v607
  %v609 = vpop.f32.mrb[0].mxu0
  %610 = vmatprep.mubr.f32.mxu0 0.0
  %611 = vmatmul.mubr.f32.gmra.mrb[0].mxu0 %v497
  %v612 = vpop.f32.mrb[0].mxu0
  %v613 = vadd.f32 %v421, %v612
  %v614 = vpop.f32.mrb[0].mxu0
  %615 = vmatprep.mubr.f32.mxu0 0.0
  %616 = vmatmul.mubr.f32.gmra.mrb[0].mxu0 %v500
  %v617 = vpop.f32.mrb[0].mxu0
  %v618 = vadd.f32 %v426, %v617
  %v619 = vpop.f32.mrb[0].mxu0
  %620 = vmatprep.mubr.f32.mxu0 0.0
  %621 = vmatmul.mubr.f32.gmra.mrb[0].mxu0 %v503
  %v622 = vpop.f32.mrb[0].mxu0
  %v623 = vadd.f32 %v431, %v622
  %v624 = vpop.f32.mrb[0].mxu0
  %625 = vmatprep.mubr.f32.mxu0 0.0
  %626 = vmatmul.mubr.f32.gmra.mrb[0].mxu0 %v506
  %v627 = vpop.f32.mrb[0].mxu0
  %v628 = vadd.f32 %v436, %v627
  %v629 = vpop.f32.mrb[0].mxu0
  %630 = vmatprep.mubr.f32.mxu0 0.0
  %631 = vmatmul.mubr.f32.gmra.mrb[0].mxu0 %v509
  %v632 = vpop.f32.mrb[0].mxu0
  %v633 = vadd.f32 %v441, %v632
  %v634 = vpop.f32.mrb[0].mxu0
  %635 = vmatprep.mubr.f32.mxu0 0.0
  %636 = vmatmul.mubr.f32.gmra.mrb[0].mxu0 %v512
  %v637 = vpop.f32.mrb[0].mxu0
  %v638 = vadd.f32 %v446, %v637
  %v639 = vpop.f32.mrb[0].mxu0
  %640 = vmatprep.mubr.f32.mxu0 0.0
  %641 = vmatmul.mubr.f32.gmra.mrb[0].mxu0 %v515
  %v642 = vpop.f32.mrb[0].mxu0
  %v643 = vadd.f32 %v451, %v642
  %v644 = vpop.f32.mrb[0].mxu0
  %645 = vmatprep.mubr.f32.mxu0 0.0
  %646 = vmatmul.mubr.f32.gmra.mrb[0].mxu0 %v518
  %v647 = vpop.f32.mrb[0].mxu0
  %v648 = vadd.f32 %v456, %v647
  %v649 = vpop.f32.mrb[0].mxu0
  %650 = vmatprep.mubr.f32.mxu0 0.0
  %651 = vmatmul.mubr.f32.gmra.mrb[0].mxu0 %v521
  %v652 = vpop.f32.mrb[0].mxu0
  %v653 = vadd.f32 %v461, %v652
  %v654 = vpop.f32.mrb[0].mxu0
  %655 = vmatprep.mubr.f32.mxu0 0.0
  %656 = vmatmul.mubr.f32.gmra.mrb[0].mxu0 %v524
  %v657 = vpop.f32.mrb[0].mxu0
  %v658 = vadd.f32 %v466, %v657
  %v659 = vpop.f32.mrb[0].mxu0
  %660 = vmatprep.mubr.f32.mxu0 0.0
  %661 = vmatmul.mubr.f32.gmra.mrb[0].mxu0 %v527
  %v662 = vpop.f32.mrb[0].mxu0
  %v663 = vadd.f32 %v471, %v662
  %v664 = vpop.f32.mrb[0].mxu0
  %665 = vmatprep.mubr.f32.mxu0 0.0
  %666 = vmatmul.mubr.f32.gmra.mrb[0].mxu0 %v530
  %v667 = vpop.f32.mrb[0].mxu0
  %v668 = vadd.f32 %v476, %v667
  %v669 = vpop.f32.mrb[0].mxu0
  %670 = vmatprep.mubr.f32.mxu0 0.0
  %671 = vmatmul.mubr.f32.gmra.mrb[0].mxu0 %v533
  %v672 = vpop.f32.mrb[0].mxu0
  %v673 = vadd.f32 %v481, %v672
  %v674 = vpop.f32.mrb[0].mxu0
  %675 = vmatprep.mubr.f32.mxu0 0.0
  %676 = vmatmul.mubr.f32.gmra.mrb[0].mxu0 %v536
  %v677 = vpop.f32.mrb[0].mxu0
  %v678 = vadd.f32 %v486, %v677
  %v679 = vpop.f32.mrb[0].mxu0
  %680 = vmatprep.mubr.f32.mxu0 0.0
  %681 = vmatmul.mubr.f32.gmra.mrb[0].mxu0 %v539
  %v682 = vpop.f32.mrb[0].mxu0
  %v683 = vadd.f32 %v491, %v682
  %v684 = vpop.f32.mrb[0].mxu0
  %685 = vdwg.mxu0
  %686 = vst [vmem:[%s7] sm:$0xff] %v608
  %687 = vst [vmem:[%s7 + $0x8] sm:$0xff] %v613
  %688 = vst [vmem:[%s7 + $0x10] sm:$0xff] %v618
  %689 = vst [vmem:[%s7 + $0x18] sm:$0xff] %v623
  %690 = vst [vmem:[%s7 + $0x20] sm:$0xff] %v628
  %691 = vst [vmem:[%s7 + $0x28] sm:$0xff] %v633
  %692 = vst [vmem:[%s7 + $0x30] sm:$0xff] %v638
  %693 = vst [vmem:[%s7 + $0x38] sm:$0xff] %v643
  %694 = vst [vmem:[%s7 + $0x40] sm:$0xff] %v648
  %695 = vst [vmem:[%s7 + $0x48] sm:$0xff] %v653
  %696 = vst [vmem:[%s7 + $0x50] sm:$0xff] %v658
  %697 = vst [vmem:[%s7 + $0x58] sm:$0xff] %v663
  %698 = vst [vmem:[%s7 + $0x60] sm:$0xff] %v668
  %699 = vst [vmem:[%s7 + $0x68] sm:$0xff] %v673
  %700 = vst [vmem:[%s7 + $0x70] sm:$0xff] %v678
  %701 = vst [vmem:[%s7 + $0x78] sm:$0xff] %v683
  // Predicated region
  $region30: #{run_decoder_head_t.1} parent=0 // pred_check
    _
  $region31: #{run_decoder_head_t.1} parent=0 // pred_check_branch
    %703 = sbr.rel (0) target = $region33
  $region32: #{run_decoder_head_t.1} parent=0 // pred_region
    _
  $region33: #{run_decoder_head_t.1} parent=0 // pred_fallthru
    _
  // Predicated region
  $region34: #{run_decoder_head_t.1} parent=0 // pred_check
    _
  $region35: #{run_decoder_head_t.1} parent=0 // pred_check_branch
    %705 = sbr.rel (0) target = $region37
  $region36: #{run_decoder_head_t.1} parent=0 // pred_region
    _
  $region37: #{run_decoder_head_t.1} parent=0 // pred_fallthru
    _

</llo_original>
